<compile_context>
chip_gen: v6e
topology: v6e:2x2x1
jax: 0.10.0
libtpu: 0.0.40
codegen_flags: <defaults>
</compile_context>

<pallas_src>
import functools

import numpy as np
import jax
import jax.numpy as jnp
from jax import lax
from jax.experimental import pallas as pl
from jax.experimental.pallas import tpu as pltpu


def _dw_causal_conv_kernel(x_ref, w_ref, b_ref, o_ref, *, window_size, n_convs):
    # x_ref: (bb, T, H) unpadded input tile (lane dim = H)
    # w_ref: (n, W, H)  depthwise weights, one row per token type / tap
    # b_ref: (n, H)     bias per token type
    # o_ref: (bb, T, H)
    bb, T, H = x_ref.shape
    W = window_size
    n = n_convs

    x = x_ref[...]
    w = w_ref[...]
    b = b_ref[...]
    if x.dtype != jnp.float32:          # f32 inputs: no dead casts emitted
        x = x.astype(jnp.float32)
        w = w.astype(jnp.float32)
        b = b.astype(jnp.float32)

    # Causal left pad (W-1 zero rows) built entirely in VMEM — no HBM copy.
    xp = jnp.concatenate(
        [jnp.zeros((bb, W - 1, H), jnp.float32), x], axis=1)  # (bb, T+W-1, H)

    # Token type of sequence position t is (t % n): rtg, obs, act, rtg, ...
    t_idx = lax.broadcasted_iota(jnp.int32, (bb, T, H), 1)
    j_idx = t_idx % n

    # Per-position bias, expanded in-register from the tiny (n, H) table.
    acc = jnp.zeros((bb, T, H), jnp.float32)
    for j in range(n):
        acc = jnp.where(j_idx == j, jnp.broadcast_to(b[j], (bb, T, H)), acc)

    # Conv taps: static sublane-offset views of the padded tile, with the
    # per-position weight row selected in-register from the (n, W, H) table.
    for k in range(W):
        xs = xp[:, k:k + T, :]
        w_k = jnp.zeros((bb, T, H), jnp.float32)
        for j in range(n):
            w_k = jnp.where(j_idx == j,
                            jnp.broadcast_to(w[j, k], (bb, T, H)), w_k)
        acc = acc + w_k * xs

    o_ref[...] = acc.astype(o_ref.dtype)


def convolution_forward(x, weights, biases, window_size, batch_block=None):
    """Causal per-token-type depthwise conv.

    x:        (B, T, H)
    weights:  list of n arrays, each (H, W)  (depthwise Conv1d kernels)
    biases:   list of n arrays, each (H,)
    Returns:  (B, T, H), same semantics as the PyTorch module with
              use_condition=use_action=True when n == 3 (rtg, obs, act order).
    """
    B, T, H = x.shape
    W = window_size
    n = len(weights)

    # Tiny parameter tables, lane-major in H; DMA'd to VMEM once (constant
    # index_map) instead of materializing a (W, T, H) effective-weight tensor.
    w_tab = jnp.transpose(jnp.stack(weights, axis=0), (0, 2, 1))  # (n, W, H)
    b_tab = jnp.stack(biases, axis=0)                             # (n, H)

    # Batch tile: target ~1024 sublane rows of work per grid step (amortizes
    # per-step overhead, keeps the per-step VMEM footprint small enough for
    # v7x's 64 MiB), capped at B and forced to divide B.  At the demo size the
    # whole problem runs in a single grid step.
    if batch_block is None:
        batch_block = max(1, min(B, (1024 + T - 1) // T))
    batch_block = min(batch_block, B)
    while B % batch_block:
        batch_block -= 1
    grid = (B // batch_block,)

    kernel = functools.partial(
        _dw_causal_conv_kernel, window_size=W, n_convs=n)

    # TODO(synk): with H < 128 the lane dimension is under-utilised; the real
    # model config should use hidden_size >= 128 (or fold token types into
    # lanes) — not changed here to keep the module's (B, T, H) layout.
    return pl.pallas_call(
        kernel,
        out_shape=jax.ShapeDtypeStruct((B, T, H), x.dtype),
        grid_spec=pl.GridSpec(
            grid=grid,
            in_specs=[
                pl.BlockSpec((batch_block, T, H), lambda i: (i, 0, 0)),
                pl.BlockSpec((n, W, H), lambda i: (0, 0, 0)),
                pl.BlockSpec((n, H), lambda i: (0, 0)),
            ],
            out_specs=pl.BlockSpec((batch_block, T, H), lambda i: (i, 0, 0)),
        ),
        compiler_params=pltpu.CompilerParams(
            dimension_semantics=("parallel",),
        ),
    )(x, w_tab, b_tab)


def _ref_forward(x, weights, biases, window_size):
    """Independent NumPy reference mirroring the PyTorch module semantics."""
    x = np.asarray(x, np.float32)
    ws = [np.asarray(w, np.float32) for w in weights]
    bs = [np.asarray(b, np.float32) for b in biases]
    B, T, H = x.shape
    W = window_size
    n = len(ws)
    xp = np.zeros((B, T + W - 1, H), np.float32)
    xp[:, W - 1:, :] = x
    out = np.zeros((B, T, H), np.float32)
    for t in range(T):
        j = t % n  # rtg at t%3==0, obs at t%3==1, act at t%3==2
        for k in range(W):
            out[:, t, :] += xp[:, t + k, :] * ws[j][:, k][None, :]
        out[:, t, :] += bs[j][None, :]
    return out


if __name__ == "__main__":
    # Config: hidden_size=32, window_size=4, use_condition=True, use_action=True
    B, T, H, W = 2, 9, 32, 4  # T = 3 timesteps * 3 token types (rtg, obs, act)

    key = jax.random.PRNGKey(0)
    ks = jax.random.split(key, 7)
    bound = 1.0 / np.sqrt(W)  # PyTorch Conv1d default init bound (fan_in = 1*W)

    # Depthwise Conv1d params: weight (H, 1, W) -> stored as (H, W); bias (H,)
    w_rtg = jax.random.uniform(ks[0], (H, W), jnp.float32, -bound, bound)
    b_rtg = jax.random.uniform(ks[1], (H,), jnp.float32, -bound, bound)
    w_obs = jax.random.uniform(ks[2], (H, W), jnp.float32, -bound, bound)
    b_obs = jax.random.uniform(ks[3], (H,), jnp.float32, -bound, bound)
    w_act = jax.random.uniform(ks[4], (H, W), jnp.float32, -bound, bound)
    b_act = jax.random.uniform(ks[5], (H,), jnp.float32, -bound, bound)

    x = jax.random.normal(ks[6], (B, T, H), jnp.float32)

    weights = [w_rtg, w_obs, w_act]
    biases = [b_rtg, b_obs, b_act]

    out = convolution_forward(x, weights, biases, window_size=W)
    out = jax.block_until_ready(out)

    ref = _ref_forward(x, weights, biases, window_size=W)
    np.testing.assert_allclose(np.asarray(out), ref, rtol=1e-5, atol=1e-5)

    print("KERNEL_OK")
</pallas_src>

<mosaic_0001>
module attributes {stable_mosaic.version = 11 : i64} {
  func.func @_dw_causal_conv_kernel(%arg0: i32, %arg1: memref<2x9x32xf32, #tpu.memory_space<vmem>>, %arg2: memref<3x4x32xf32, #tpu.memory_space<vmem>>, %arg3: memref<3x32xf32, #tpu.memory_space<vmem>>, %arg4: memref<2x9x32xf32, #tpu.memory_space<vmem>>) attributes {dimension_semantics = [#tpu.dimension_semantics<parallel>], iteration_bounds = array<i64: 1>, scalar_prefetch = 0 : i64, scratch_operands = 0 : i64, tpu.core_type = #tpu.core_type<tc>, window_params = [{transform_indices = @transform_0, window_bounds = array<i64: 2, 9, 32>}, {pipeline_mode = #tpu.pipeline_mode<synchronous>, transform_indices = @transform_1, window_bounds = array<i64: 3, 4, 32>}, {pipeline_mode = #tpu.pipeline_mode<synchronous>, transform_indices = @transform_2, window_bounds = array<i64: 3, 32>}, {transform_indices = @transform_3, window_bounds = array<i64: 2, 9, 32>}]} {
    %c0 = arith.constant 0 : index
    %c0_0 = arith.constant 0 : index
    %c0_1 = arith.constant 0 : index
    %0 = vector.load %arg1[%c0, %c0_0, %c0_1] : memref<2x9x32xf32, #tpu.memory_space<vmem>>, vector<2x9x32xf32>
    %c0_2 = arith.constant 0 : index
    %c0_3 = arith.constant 0 : index
    %c0_4 = arith.constant 0 : index
    %1 = vector.load %arg2[%c0_2, %c0_3, %c0_4] : memref<3x4x32xf32, #tpu.memory_space<vmem>>, vector<3x4x32xf32>
    %c0_5 = arith.constant 0 : index
    %c0_6 = arith.constant 0 : index
    %2 = vector.load %arg3[%c0_5, %c0_6] : memref<3x32xf32, #tpu.memory_space<vmem>>, vector<3x32xf32>
    %cst = arith.constant 0.000000e+00 : f32
    %3 = vector.broadcast %cst : f32 to vector<2x3x32xf32>
    %4 = tpu.concatenate %3, %0 in 1 : vector<2x3x32xf32>, vector<2x9x32xf32> -> vector<2x12x32xf32>
    %5 = tpu.iota {dimensions = array<i32: 1>} : vector<2x9x32xi32>
    %c3_i32 = arith.constant 3 : i32
    %c0_i32 = arith.constant 0 : i32
    %6 = arith.cmpi eq, %c3_i32, %c0_i32 : i32
    %c1_i32 = arith.constant 1 : i32
    %7 = arith.select %6, %c1_i32, %c3_i32 : i32
    %8 = vector.broadcast %7 : i32 to vector<2x9x32xi32>
    %9 = arith.remsi %5, %8 : vector<2x9x32xi32>
    %c0_i32_7 = arith.constant 0 : i32
    %10 = vector.broadcast %c0_i32_7 : i32 to vector<2x9x32xi32>
    %11 = arith.cmpi ne, %9, %10 : vector<2x9x32xi32>
    %c0_i32_8 = arith.constant 0 : i32
    %12 = vector.broadcast %c0_i32_8 : i32 to vector<2x9x32xi32>
    %13 = arith.cmpi slt, %9, %12 : vector<2x9x32xi32>
    %c0_i32_9 = arith.constant 0 : i32
    %14 = arith.cmpi slt, %7, %c0_i32_9 : i32
    %15 = vector.broadcast %14 : i1 to vector<2x9x32xi1>
    %16 = vector.broadcast %15 : vector<2x9x32xi1> to vector<2x9x32xi1>
    %17 = arith.xori %13, %16 : vector<2x9x32xi1>
    %18 = arith.andi %17, %11 : vector<2x9x32xi1>
    %19 = vector.broadcast %7 : i32 to vector<2x9x32xi32>
    %20 = arith.addi %9, %19 : vector<2x9x32xi32>
    %21 = arith.select %18, %20, %9 : vector<2x9x32xi1>, vector<2x9x32xi32>
    %cst_10 = arith.constant 0.000000e+00 : f32
    %22 = vector.broadcast %cst_10 : f32 to vector<2x9x32xf32>
    %c0_i32_11 = arith.constant 0 : i32
    %23 = vector.broadcast %c0_i32_11 : i32 to vector<2x9x32xi32>
    %24 = arith.cmpi eq, %21, %23 : vector<2x9x32xi32>
    %25 = vector.extract_strided_slice %2 {offsets = [0, 0], sizes = [1, 32], strides = [1, 1]} : vector<3x32xf32> to vector<1x32xf32>
    %26 = vector.shape_cast %25 : vector<1x32xf32> to vector<32xf32>
    %27 = vector.shape_cast %26 : vector<32xf32> to vector<1x1x32xf32>
    %28 = vector.broadcast %27 : vector<1x1x32xf32> to vector<2x9x32xf32>
    %29 = arith.select %24, %28, %22 : vector<2x9x32xi1>, vector<2x9x32xf32>
    %c1_i32_12 = arith.constant 1 : i32
    %30 = vector.broadcast %c1_i32_12 : i32 to vector<2x9x32xi32>
    %31 = arith.cmpi eq, %21, %30 : vector<2x9x32xi32>
    %32 = vector.extract_strided_slice %2 {offsets = [1, 0], sizes = [1, 32], strides = [1, 1]} : vector<3x32xf32> to vector<1x32xf32>
    %33 = vector.shape_cast %32 : vector<1x32xf32> to vector<32xf32>
    %34 = vector.shape_cast %33 : vector<32xf32> to vector<1x1x32xf32>
    %35 = vector.broadcast %34 : vector<1x1x32xf32> to vector<2x9x32xf32>
    %36 = arith.select %31, %35, %29 : vector<2x9x32xi1>, vector<2x9x32xf32>
    %c2_i32 = arith.constant 2 : i32
    %37 = vector.broadcast %c2_i32 : i32 to vector<2x9x32xi32>
    %38 = arith.cmpi eq, %21, %37 : vector<2x9x32xi32>
    %39 = vector.extract_strided_slice %2 {offsets = [2, 0], sizes = [1, 32], strides = [1, 1]} : vector<3x32xf32> to vector<1x32xf32>
    %40 = vector.shape_cast %39 : vector<1x32xf32> to vector<32xf32>
    %41 = vector.shape_cast %40 : vector<32xf32> to vector<1x1x32xf32>
    %42 = vector.broadcast %41 : vector<1x1x32xf32> to vector<2x9x32xf32>
    %43 = arith.select %38, %42, %36 : vector<2x9x32xi1>, vector<2x9x32xf32>
    %44 = vector.extract_strided_slice %4 {offsets = [0, 0, 0], sizes = [2, 9, 32], strides = [1, 1, 1]} : vector<2x12x32xf32> to vector<2x9x32xf32>
    %cst_13 = arith.constant 0.000000e+00 : f32
    %45 = vector.broadcast %cst_13 : f32 to vector<2x9x32xf32>
    %c0_i32_14 = arith.constant 0 : i32
    %46 = vector.broadcast %c0_i32_14 : i32 to vector<2x9x32xi32>
    %47 = arith.cmpi eq, %21, %46 : vector<2x9x32xi32>
    %48 = vector.extract_strided_slice %1 {offsets = [0, 0, 0], sizes = [1, 1, 32], strides = [1, 1, 1]} : vector<3x4x32xf32> to vector<1x1x32xf32>
    %49 = vector.shape_cast %48 : vector<1x1x32xf32> to vector<32xf32>
    %50 = vector.shape_cast %49 : vector<32xf32> to vector<1x1x32xf32>
    %51 = vector.broadcast %50 : vector<1x1x32xf32> to vector<2x9x32xf32>
    %52 = arith.select %47, %51, %45 : vector<2x9x32xi1>, vector<2x9x32xf32>
    %c1_i32_15 = arith.constant 1 : i32
    %53 = vector.broadcast %c1_i32_15 : i32 to vector<2x9x32xi32>
    %54 = arith.cmpi eq, %21, %53 : vector<2x9x32xi32>
    %55 = vector.extract_strided_slice %1 {offsets = [1, 0, 0], sizes = [1, 1, 32], strides = [1, 1, 1]} : vector<3x4x32xf32> to vector<1x1x32xf32>
    %56 = vector.shape_cast %55 : vector<1x1x32xf32> to vector<32xf32>
    %57 = vector.shape_cast %56 : vector<32xf32> to vector<1x1x32xf32>
    %58 = vector.broadcast %57 : vector<1x1x32xf32> to vector<2x9x32xf32>
    %59 = arith.select %54, %58, %52 : vector<2x9x32xi1>, vector<2x9x32xf32>
    %c2_i32_16 = arith.constant 2 : i32
    %60 = vector.broadcast %c2_i32_16 : i32 to vector<2x9x32xi32>
    %61 = arith.cmpi eq, %21, %60 : vector<2x9x32xi32>
    %62 = vector.extract_strided_slice %1 {offsets = [2, 0, 0], sizes = [1, 1, 32], strides = [1, 1, 1]} : vector<3x4x32xf32> to vector<1x1x32xf32>
    %63 = vector.shape_cast %62 : vector<1x1x32xf32> to vector<32xf32>
    %64 = vector.shape_cast %63 : vector<32xf32> to vector<1x1x32xf32>
    %65 = vector.broadcast %64 : vector<1x1x32xf32> to vector<2x9x32xf32>
    %66 = arith.select %61, %65, %59 : vector<2x9x32xi1>, vector<2x9x32xf32>
    %67 = arith.mulf %66, %44 : vector<2x9x32xf32>
    %68 = arith.addf %43, %67 : vector<2x9x32xf32>
    %69 = vector.extract_strided_slice %4 {offsets = [0, 1, 0], sizes = [2, 9, 32], strides = [1, 1, 1]} : vector<2x12x32xf32> to vector<2x9x32xf32>
    %cst_17 = arith.constant 0.000000e+00 : f32
    %70 = vector.broadcast %cst_17 : f32 to vector<2x9x32xf32>
    %c0_i32_18 = arith.constant 0 : i32
    %71 = vector.broadcast %c0_i32_18 : i32 to vector<2x9x32xi32>
    %72 = arith.cmpi eq, %21, %71 : vector<2x9x32xi32>
    %73 = vector.extract_strided_slice %1 {offsets = [0, 1, 0], sizes = [1, 1, 32], strides = [1, 1, 1]} : vector<3x4x32xf32> to vector<1x1x32xf32>
    %74 = vector.shape_cast %73 : vector<1x1x32xf32> to vector<32xf32>
    %75 = vector.shape_cast %74 : vector<32xf32> to vector<1x1x32xf32>
    %76 = vector.broadcast %75 : vector<1x1x32xf32> to vector<2x9x32xf32>
    %77 = arith.select %72, %76, %70 : vector<2x9x32xi1>, vector<2x9x32xf32>
    %c1_i32_19 = arith.constant 1 : i32
    %78 = vector.broadcast %c1_i32_19 : i32 to vector<2x9x32xi32>
    %79 = arith.cmpi eq, %21, %78 : vector<2x9x32xi32>
    %80 = vector.extract_strided_slice %1 {offsets = [1, 1, 0], sizes = [1, 1, 32], strides = [1, 1, 1]} : vector<3x4x32xf32> to vector<1x1x32xf32>
    %81 = vector.shape_cast %80 : vector<1x1x32xf32> to vector<32xf32>
    %82 = vector.shape_cast %81 : vector<32xf32> to vector<1x1x32xf32>
    %83 = vector.broadcast %82 : vector<1x1x32xf32> to vector<2x9x32xf32>
    %84 = arith.select %79, %83, %77 : vector<2x9x32xi1>, vector<2x9x32xf32>
    %c2_i32_20 = arith.constant 2 : i32
    %85 = vector.broadcast %c2_i32_20 : i32 to vector<2x9x32xi32>
    %86 = arith.cmpi eq, %21, %85 : vector<2x9x32xi32>
    %87 = vector.extract_strided_slice %1 {offsets = [2, 1, 0], sizes = [1, 1, 32], strides = [1, 1, 1]} : vector<3x4x32xf32> to vector<1x1x32xf32>
    %88 = vector.shape_cast %87 : vector<1x1x32xf32> to vector<32xf32>
    %89 = vector.shape_cast %88 : vector<32xf32> to vector<1x1x32xf32>
    %90 = vector.broadcast %89 : vector<1x1x32xf32> to vector<2x9x32xf32>
    %91 = arith.select %86, %90, %84 : vector<2x9x32xi1>, vector<2x9x32xf32>
    %92 = arith.mulf %91, %69 : vector<2x9x32xf32>
    %93 = arith.addf %68, %92 : vector<2x9x32xf32>
    %94 = vector.extract_strided_slice %4 {offsets = [0, 2, 0], sizes = [2, 9, 32], strides = [1, 1, 1]} : vector<2x12x32xf32> to vector<2x9x32xf32>
    %cst_21 = arith.constant 0.000000e+00 : f32
    %95 = vector.broadcast %cst_21 : f32 to vector<2x9x32xf32>
    %c0_i32_22 = arith.constant 0 : i32
    %96 = vector.broadcast %c0_i32_22 : i32 to vector<2x9x32xi32>
    %97 = arith.cmpi eq, %21, %96 : vector<2x9x32xi32>
    %98 = vector.extract_strided_slice %1 {offsets = [0, 2, 0], sizes = [1, 1, 32], strides = [1, 1, 1]} : vector<3x4x32xf32> to vector<1x1x32xf32>
    %99 = vector.shape_cast %98 : vector<1x1x32xf32> to vector<32xf32>
    %100 = vector.shape_cast %99 : vector<32xf32> to vector<1x1x32xf32>
    %101 = vector.broadcast %100 : vector<1x1x32xf32> to vector<2x9x32xf32>
    %102 = arith.select %97, %101, %95 : vector<2x9x32xi1>, vector<2x9x32xf32>
    %c1_i32_23 = arith.constant 1 : i32
    %103 = vector.broadcast %c1_i32_23 : i32 to vector<2x9x32xi32>
    %104 = arith.cmpi eq, %21, %103 : vector<2x9x32xi32>
    %105 = vector.extract_strided_slice %1 {offsets = [1, 2, 0], sizes = [1, 1, 32], strides = [1, 1, 1]} : vector<3x4x32xf32> to vector<1x1x32xf32>
    %106 = vector.shape_cast %105 : vector<1x1x32xf32> to vector<32xf32>
    %107 = vector.shape_cast %106 : vector<32xf32> to vector<1x1x32xf32>
    %108 = vector.broadcast %107 : vector<1x1x32xf32> to vector<2x9x32xf32>
    %109 = arith.select %104, %108, %102 : vector<2x9x32xi1>, vector<2x9x32xf32>
    %c2_i32_24 = arith.constant 2 : i32
    %110 = vector.broadcast %c2_i32_24 : i32 to vector<2x9x32xi32>
    %111 = arith.cmpi eq, %21, %110 : vector<2x9x32xi32>
    %112 = vector.extract_strided_slice %1 {offsets = [2, 2, 0], sizes = [1, 1, 32], strides = [1, 1, 1]} : vector<3x4x32xf32> to vector<1x1x32xf32>
    %113 = vector.shape_cast %112 : vector<1x1x32xf32> to vector<32xf32>
    %114 = vector.shape_cast %113 : vector<32xf32> to vector<1x1x32xf32>
    %115 = vector.broadcast %114 : vector<1x1x32xf32> to vector<2x9x32xf32>
    %116 = arith.select %111, %115, %109 : vector<2x9x32xi1>, vector<2x9x32xf32>
    %117 = arith.mulf %116, %94 : vector<2x9x32xf32>
    %118 = arith.addf %93, %117 : vector<2x9x32xf32>
    %119 = vector.extract_strided_slice %4 {offsets = [0, 3, 0], sizes = [2, 9, 32], strides = [1, 1, 1]} : vector<2x12x32xf32> to vector<2x9x32xf32>
    %cst_25 = arith.constant 0.000000e+00 : f32
    %120 = vector.broadcast %cst_25 : f32 to vector<2x9x32xf32>
    %c0_i32_26 = arith.constant 0 : i32
    %121 = vector.broadcast %c0_i32_26 : i32 to vector<2x9x32xi32>
    %122 = arith.cmpi eq, %21, %121 : vector<2x9x32xi32>
    %123 = vector.extract_strided_slice %1 {offsets = [0, 3, 0], sizes = [1, 1, 32], strides = [1, 1, 1]} : vector<3x4x32xf32> to vector<1x1x32xf32>
    %124 = vector.shape_cast %123 : vector<1x1x32xf32> to vector<32xf32>
    %125 = vector.shape_cast %124 : vector<32xf32> to vector<1x1x32xf32>
    %126 = vector.broadcast %125 : vector<1x1x32xf32> to vector<2x9x32xf32>
    %127 = arith.select %122, %126, %120 : vector<2x9x32xi1>, vector<2x9x32xf32>
    %c1_i32_27 = arith.constant 1 : i32
    %128 = vector.broadcast %c1_i32_27 : i32 to vector<2x9x32xi32>
    %129 = arith.cmpi eq, %21, %128 : vector<2x9x32xi32>
    %130 = vector.extract_strided_slice %1 {offsets = [1, 3, 0], sizes = [1, 1, 32], strides = [1, 1, 1]} : vector<3x4x32xf32> to vector<1x1x32xf32>
    %131 = vector.shape_cast %130 : vector<1x1x32xf32> to vector<32xf32>
    %132 = vector.shape_cast %131 : vector<32xf32> to vector<1x1x32xf32>
    %133 = vector.broadcast %132 : vector<1x1x32xf32> to vector<2x9x32xf32>
    %134 = arith.select %129, %133, %127 : vector<2x9x32xi1>, vector<2x9x32xf32>
    %c2_i32_28 = arith.constant 2 : i32
    %135 = vector.broadcast %c2_i32_28 : i32 to vector<2x9x32xi32>
    %136 = arith.cmpi eq, %21, %135 : vector<2x9x32xi32>
    %137 = vector.extract_strided_slice %1 {offsets = [2, 3, 0], sizes = [1, 1, 32], strides = [1, 1, 1]} : vector<3x4x32xf32> to vector<1x1x32xf32>
    %138 = vector.shape_cast %137 : vector<1x1x32xf32> to vector<32xf32>
    %139 = vector.shape_cast %138 : vector<32xf32> to vector<1x1x32xf32>
    %140 = vector.broadcast %139 : vector<1x1x32xf32> to vector<2x9x32xf32>
    %141 = arith.select %136, %140, %134 : vector<2x9x32xi1>, vector<2x9x32xf32>
    %142 = arith.mulf %141, %119 : vector<2x9x32xf32>
    %143 = arith.addf %118, %142 : vector<2x9x32xf32>
    %c0_29 = arith.constant 0 : index
    %c0_30 = arith.constant 0 : index
    %c0_31 = arith.constant 0 : index
    %144 = vector.load %arg4[%c0_29, %c0_30, %c0_31] : memref<2x9x32xf32, #tpu.memory_space<vmem>>, vector<2x9x32xf32>
    tpu.vector_store %arg4[%c0_29, %c0_30, %c0_31], %143 {strides = array<i32>} : memref<2x9x32xf32, #tpu.memory_space<vmem>>, vector<2x9x32xf32>,
    return
  }
  func.func @transform_0(%arg0: i32) -> (i32, i32, i32) {
    %c0_i32 = arith.constant 0 : i32
    %c0_i32_0 = arith.constant 0 : i32
    %c0_i32_1 = arith.constant 0 : i32
    return %arg0, %c0_i32, %c0_i32_0 : i32, i32, i32
  }
  func.func @transform_1(%arg0: i32) -> (i32, i32, i32) {
    %c0_i32 = arith.constant 0 : i32
    %c0_i32_0 = arith.constant 0 : i32
    %c0_i32_1 = arith.constant 0 : i32
    %c0_i32_2 = arith.constant 0 : i32
    return %c0_i32, %c0_i32_0, %c0_i32_1 : i32, i32, i32
  }
  func.func @transform_2(%arg0: i32) -> (i32, i32) {
    %c0_i32 = arith.constant 0 : i32
    %c0_i32_0 = arith.constant 0 : i32
    %c0_i32_1 = arith.constant 0 : i32
    return %c0_i32, %c0_i32_0 : i32, i32
  }
  func.func @transform_3(%arg0: i32) -> (i32, i32, i32) {
    %c0_i32 = arith.constant 0 : i32
    %c0_i32_0 = arith.constant 0 : i32
    %c0_i32_1 = arith.constant 0 : i32
    return %arg0, %c0_i32, %c0_i32_0 : i32, i32, i32
  }
}

</mosaic_0001>

<llo_original>
// kernel: tpu_custom_call.1
$region0: #{tpu_custom_call.1}
  #allocation0 [shape = 'u32[]', space=smem, size = 0x4, offset = 0x4, fixed_abs, tag = 'smem constant byte address 0x4 - core index']
  #allocation1 [shape = 'u32[144,128]{1,0:T(1,128)}', space=vmem, size = 0x12000, scoped, tag = 'internal scratch']
  %s0 = inlined_call_operand.vmem [shape: f32[2,9,32], index: 0, kind: input, shape index: {}]
  %s1 = inlined_call_operand.vmem [shape: f32[3,4,32], index: 1, kind: input, shape index: {}]
  %s2 = inlined_call_operand.vmem [shape: f32[3,32], index: 2, kind: input, shape index: {}]
  %s3 = inlined_call_operand.vmem [shape: f32[2,9,32], index: 3, kind: output, shape index: {}]
  %s4 = sld [smem:[#allocation0]]
  $region22: #{tpu_custom_call.1} parent=0
    _
  %s6 = ssub.s32 1, %s4
  %s7 = scalar_select 0, %s6, %s4
  // Predicated region
  $region2: #{tpu_custom_call.1} parent=0 // pred_check
    _
  $region3: #{tpu_custom_call.1} parent=0 // pred_check_branch
    %9 = sbr.rel (0) target = $region5
  $region4: #{tpu_custom_call.1} parent=0 // pred_region
    _
  $region5: #{tpu_custom_call.1} parent=0 // pred_fallthru
    _
  // Predicated region
  $region6: #{tpu_custom_call.1} parent=0 // pred_check
    _
  $region7: #{tpu_custom_call.1} parent=0 // pred_check_branch
    %11 = sbr.rel (0) target = $region9
  $region8: #{tpu_custom_call.1} parent=0 // pred_region
    _
  $region9: #{tpu_custom_call.1} parent=0 // pred_fallthru
    _
  // Predicated region
  $region10: #{tpu_custom_call.1} parent=0 // pred_check
    _
  $region11: #{tpu_custom_call.1} parent=0 // pred_check_branch
    %13 = sbr.rel (0) target = $region13
  $region12: #{tpu_custom_call.1} parent=0 // pred_region
    _
  $region13: #{tpu_custom_call.1} parent=0 // pred_fallthru
    _
  %v14 = vld [vmem:[%s0] sm:$0xff]
  %v15 = vld [vmem:[%s0 + $0x8] sm:$0x1]
  %v16 = vld [vmem:[%s0 + $0x10] sm:$0xff]
  %v17 = vld [vmem:[%s0 + $0x18] sm:$0x1]
  %v18 = vld [vmem:[%s1] sm:$0xf]
  %v19 = vld [vmem:[%s1 + $0x4] sm:$0xf]
  %v20 = vld [vmem:[%s1 + $0x8] sm:$0xf]
  %v21 = vld [vmem:[%s2] sm:$0x7]
  %vm26 = vcmask 1042432
  %v27 = vrot.slane %v14, 5
  %v28 = vrot.slane %v15, 5
  %v29 = vsel %vm26, %v27, %v28
  %v30 = vrot.slane %v16, 5
  %v31 = vrot.slane %v17, 5
  %v32 = vsel %vm26, %v30, %v31
  %v37 = vsel %vm26, 0.0, %v27
  %v38 = vsel %vm26, 0.0, %v30
  %v39 = vlaneseq
  %v40 = vshrl.u32 %v39, 7
  %v41 = vadd.s32 %v40, 8
  %vm42 = vcmp.lt.s32.totalorder %v40, 0
  %v43 = vsub.s32 0, %v40
  %v44 = vsel %vm42, %v43, %v40
  %v45 = vmul.u32.u64.compose %v44, 2863311531
  %v46 = vextract.low.u32 %v45
  %v47 = vextract.high.u32 %v45
  %v48 = vshrl.u32 %v47, 1
  %v49 = vmul.u32 %v48, 3
  %v50 = vsub.s32 %v44, %v49
  %v51 = vsub.s32 0, %v50
  %v52 = vsel %vm42, %v51, %v50
  %vm53 = vcmp.lt.s32.totalorder %v41, 0
  %v54 = vsub.s32 0, %v41
  %v55 = vsel %vm53, %v54, %v41
  %v56 = vmul.u32.u64.compose %v55, 2863311531
  %v57 = vextract.low.u32 %v56
  %v58 = vextract.high.u32 %v56
  %v59 = vshrl.u32 %v58, 1
  %v60 = vmul.u32 %v59, 3
  %v61 = vsub.s32 %v55, %v60
  %v62 = vsub.s32 0, %v61
  %v63 = vsel %vm53, %v62, %v61
  %vm64 = vcmp.ne.s32.totalorder %v52, 0
  %vm65 = vcmp.ne.s32.totalorder %v63, 0
  %vm66 = vcmp.lt.s32.totalorder %v52, 0
  %vm67 = vcmp.lt.s32.totalorder %v63, 0
  %vm68 = vmand %vm66, %vm64
  %vm69 = vmand %vm67, %vm65
  %v70 = vadd.s32 %v52, 3
  %v71 = vadd.s32 %v63, 3
  %v72 = vsel %vm68, %v70, %v52
  %v73 = vsel %vm69, %v71, %v63
  %vm74 = vcmp.eq.s32.totalorder %v72, 0
  %vm75 = vcmp.eq.s32.totalorder %v73, 0
  %v76 = vlaneseq
  %v77 = vshrl.u32 %v76, 7
  %v78 = vsub.s32 0, %v77
  %v79 = vrot.slane %v21, %v78
  %v80 = vsel %vm74, %v79, 0.0
  %v81 = vsel %vm75, %v79, 0.0
  %vm82 = vcmp.eq.s32.totalorder %v72, 1
  %vm83 = vcmp.eq.s32.totalorder %v73, 1
  %v84 = vlaneseq
  %v85 = vshrl.u32 %v84, 7
  %v86 = vsub.s32 1, %v85
  %v87 = vrot.slane %v21, %v86
  %v88 = vsel %vm82, %v87, %v80
  %v89 = vsel %vm83, %v87, %v81
  %vm90 = vcmp.eq.s32.totalorder %v72, 2
  %vm91 = vcmp.eq.s32.totalorder %v73, 2
  %v92 = vlaneseq
  %v93 = vshrl.u32 %v92, 7
  %v94 = vsub.s32 2, %v93
  %v95 = vrot.slane %v21, %v94
  %v96 = vsel %vm90, %v95, %v88
  %v97 = vsel %vm91, %v95, %v89
  %v98 = vlaneseq
  %v99 = vshrl.u32 %v98, 7
  %v100 = vsub.s32 0, %v99
  %v101 = vrot.slane %v18, %v100
  %v102 = vsel %vm74, %v101, 0.0
  %v103 = vsel %vm75, %v101, 0.0
  %v104 = vlaneseq
  %v105 = vshrl.u32 %v104, 7
  %v106 = vsub.s32 0, %v105
  %v107 = vrot.slane %v19, %v106
  %v108 = vsel %vm82, %v107, %v102
  %v109 = vsel %vm83, %v107, %v103
  %v110 = vlaneseq
  %v111 = vshrl.u32 %v110, 7
  %v112 = vsub.s32 0, %v111
  %v113 = vrot.slane %v20, %v112
  %v114 = vsel %vm90, %v113, %v108
  %v115 = vsel %vm91, %v113, %v109
  %v116 = vmul.f32 %v114, %v37
  %v117 = vmul.f32 %v115, %v29
  %v118 = vmul.f32 %v114, %v38
  %v119 = vmul.f32 %v115, %v32
  %v120 = vadd.f32 %v96, %v116
  %v121 = vadd.f32 %v97, %v117
  %v122 = vadd.f32 %v96, %v118
  %v123 = vadd.f32 %v97, %v119
  %v124 = vlaneseq
  %v125 = vshrl.u32 %v124, 7
  %v126 = vsub.s32 1, %v125
  %v127 = vrot.slane %v18, %v126
  %v128 = vsel %vm74, %v127, 0.0
  %v129 = vsel %vm75, %v127, 0.0
  %v130 = vlaneseq
  %v131 = vshrl.u32 %v130, 7
  %v132 = vsub.s32 1, %v131
  %v133 = vrot.slane %v19, %v132
  %v134 = vsel %vm82, %v133, %v128
  %v135 = vsel %vm83, %v133, %v129
  %v136 = vlaneseq
  %v137 = vshrl.u32 %v136, 7
  %v138 = vsub.s32 1, %v137
  %v139 = vrot.slane %v20, %v138
  %v140 = vsel %vm90, %v139, %v134
  %v141 = vsel %vm91, %v139, %v135
  %vm144 = vcmask 1046528
  %v145 = vrot.slane %v37, 1
  %v146 = vrot.slane %v29, 1
  %v147 = vsel %vm144, %v145, %v146
  %v148 = vrot.slane %v38, 1
  %v149 = vrot.slane %v32, 1
  %v150 = vsel %vm144, %v148, %v149
  %v155 = vmul.f32 %v140, %v147
  %v156 = vmul.f32 %v141, %v146
  %v157 = vmul.f32 %v140, %v150
  %v158 = vmul.f32 %v141, %v149
  %v159 = vadd.f32 %v120, %v155
  %v160 = vadd.f32 %v121, %v156
  %v161 = vadd.f32 %v122, %v157
  %v162 = vadd.f32 %v123, %v158
  %v163 = vlaneseq
  %v164 = vshrl.u32 %v163, 7
  %v165 = vsub.s32 2, %v164
  %v166 = vrot.slane %v18, %v165
  %v167 = vsel %vm74, %v166, 0.0
  %v168 = vsel %vm75, %v166, 0.0
  %v169 = vlaneseq
  %v170 = vshrl.u32 %v169, 7
  %v171 = vsub.s32 2, %v170
  %v172 = vrot.slane %v19, %v171
  %v173 = vsel %vm82, %v172, %v167
  %v174 = vsel %vm83, %v172, %v168
  %v175 = vlaneseq
  %v176 = vshrl.u32 %v175, 7
  %v177 = vsub.s32 2, %v176
  %v178 = vrot.slane %v20, %v177
  %v179 = vsel %vm90, %v178, %v173
  %v180 = vsel %vm91, %v178, %v174
  %vm181 = vcmask 1045504
  %v182 = vrot.slane %v37, 2
  %v183 = vrot.slane %v29, 2
  %v184 = vsel %vm181, %v182, %v183
  %v185 = vrot.slane %v38, 2
  %v186 = vrot.slane %v32, 2
  %v187 = vsel %vm181, %v185, %v186
  %v192 = vmul.f32 %v179, %v184
  %v193 = vmul.f32 %v180, %v183
  %v194 = vmul.f32 %v179, %v187
  %v195 = vmul.f32 %v180, %v186
  %v196 = vadd.f32 %v159, %v192
  %v197 = vadd.f32 %v160, %v193
  %v198 = vadd.f32 %v161, %v194
  %v199 = vadd.f32 %v162, %v195
  %v200 = vlaneseq
  %v201 = vshrl.u32 %v200, 7
  %v202 = vsub.s32 3, %v201
  %v203 = vrot.slane %v18, %v202
  %v204 = vsel %vm74, %v203, 0.0
  %v205 = vsel %vm75, %v203, 0.0
  %v206 = vlaneseq
  %v207 = vshrl.u32 %v206, 7
  %v208 = vsub.s32 3, %v207
  %v209 = vrot.slane %v19, %v208
  %v210 = vsel %vm82, %v209, %v204
  %v211 = vsel %vm83, %v209, %v205
  %v212 = vlaneseq
  %v213 = vshrl.u32 %v212, 7
  %v214 = vsub.s32 3, %v213
  %v215 = vrot.slane %v20, %v214
  %v216 = vsel %vm90, %v215, %v210
  %v217 = vsel %vm91, %v215, %v211
  %vm218 = vcmask 1044480
  %v219 = vrot.slane %v37, 3
  %v220 = vrot.slane %v29, 3
  %v221 = vsel %vm218, %v219, %v220
  %v222 = vrot.slane %v38, 3
  %v223 = vrot.slane %v32, 3
  %v224 = vsel %vm218, %v222, %v223
  %v229 = vmul.f32 %v216, %v221
  %v230 = vmul.f32 %v217, %v220
  %v231 = vmul.f32 %v216, %v224
  %v232 = vmul.f32 %v217, %v223
  %v233 = vadd.f32 %v196, %v229
  %v234 = vadd.f32 %v197, %v230
  %v235 = vadd.f32 %v198, %v231
  %v236 = vadd.f32 %v199, %v232
  %vm237 = vcmask 261120
  %238 = vst.msk [vmem:[%s3] sm:$0xff] %vm237, %v233
  %vm239 = vcmask 253952
  %240 = vst.msk [vmem:[%s3 + $0x8] sm:$0x1] %vm239, %v234
  %241 = vst.msk [vmem:[%s3 + $0x10] sm:$0xff] %vm237, %v235
  %242 = vst.msk [vmem:[%s3 + $0x18] sm:$0x1] %vm239, %v236
  // Predicated region
  $region14: #{tpu_custom_call.1} parent=0 // pred_check
    _
  $region15: #{tpu_custom_call.1} parent=0 // pred_check_branch
    %244 = sbr.rel (0) target = $region17
  $region16: #{tpu_custom_call.1} parent=0 // pred_region
    _
  $region17: #{tpu_custom_call.1} parent=0 // pred_fallthru
    _
  // Predicated region
  $region18: #{tpu_custom_call.1} parent=0 // pred_check
    _
  $region19: #{tpu_custom_call.1} parent=0 // pred_check_branch
    %246 = sbr.rel (0) target = $region21
  $region20: #{tpu_custom_call.1} parent=0 // pred_region
    _
  $region21: #{tpu_custom_call.1} parent=0 // pred_fallthru
    _

</llo_original>
